<compile_context>
chip_gen: v5e
topology: v5e:2x2
jax: 0.10.0
libtpu: 0.0.40
codegen_flags: <defaults>
</compile_context>

<pallas_src>
import jax
import jax.numpy as jnp
from jax.experimental import pallas as pl
from jax.experimental.pallas import tpu as pltpu


def gating_kernel(x_ref, wih_ref, whh_ref, b_ref, wfc_ref, bfc_ref, out_ref):
    """LSTM recurrence (batch element 0 only) + gating head, fully in VMEM.

    x_ref   : (T, D)   input sequence for batch element 0 (f32)
    wih_ref : (D, 4H)  W_ih^T (f32)
    whh_ref : (H, 4H)  W_hh^T (bf16, pre-cast)
    b_ref   : (1, 4H)  b_ih + b_hh (f32)
    wfc_ref : (H, E)   W_fc^T (f32)
    bfc_ref : (1, E)   b_fc (f32)
    out_ref : (T, E)   softmax gating weights (f32)
    """
    T = x_ref.shape[0]
    H = whh_ref.shape[0]

    # Loop invariant hoisted out of the recurrence (W_hh^T is only a couple of
    # vregs in bf16); Mosaic can keep it resident / latched for the MXU.
    whh = whh_ref[...]                                               # (H,4H) bf16

    # Input projection for all T steps at once, bias folded in here: removes
    # one MXU push/pop and one bias broadcast per time step.
    xproj = jnp.dot(x_ref[...], wih_ref[...],
                    preferred_element_type=jnp.float32) + b_ref[...]  # (T,4H) f32

    h = jnp.zeros((1, H), jnp.float32)
    c = jnp.zeros((1, H), jnp.float32)
    hs = []

    # T is a small static Python int -> fully unrolled straight-line code; the
    # LLO scheduler can overlap step t+1's MXU push with step t's EUP/VPU gate
    # math.  (For large T, switch to lax.fori_loop(unroll=4..8) + a VMEM
    # scratch for the hidden history to bound vreg pressure.)
    for t in range(T):
        # Single bf16 MXU pass on the critical h->h chain.
        gates = xproj[t:t + 1, :] + jnp.dot(
            h.astype(jnp.bfloat16), whh,
            preferred_element_type=jnp.float32)                      # (1,4H) f32
        # One sigmoid pass and one tanh pass over the whole gates vreg, then
        # lane-slice: 3 EUP pushes/step (sig, tanh(gates), tanh(c)) instead
        # of 5, with the XLU extracts behind the EUP rather than in front.
        # PyTorch LSTM gate order: i, f, g, o.
        sig = jax.nn.sigmoid(gates)
        tnh = jnp.tanh(gates)
        i_g = sig[:, 0 * H:1 * H]
        f_g = sig[:, 1 * H:2 * H]
        g_g = tnh[:, 2 * H:3 * H]
        o_g = sig[:, 3 * H:4 * H]
        c = f_g * c + i_g * g_g
        h = o_g * jnp.tanh(c)
        hs.append(h)                 # stays in vregs; no per-step VMEM store

    hs_all = jnp.concatenate(hs, axis=0)                             # (T,H) f32

    logits = jnp.dot(hs_all, wfc_ref[...],
                     preferred_element_type=jnp.float32) + bfc_ref[...]  # (T,E)
    m = jnp.max(logits, axis=1, keepdims=True)
    e = jnp.exp(logits - m)
    out_ref[...] = e * pl.reciprocal(jnp.sum(e, axis=1, keepdims=True),
                                     approx=True)


def prepare_params(params):
    """One-time parameter prep (transposes / bias fold / bf16 cast) so the
    jitted forward path contains nothing but the pallas_call."""
    w_ih, w_hh, b_ih, b_hh, w_fc, b_fc = params
    wih_t = jnp.asarray(w_ih.T, jnp.float32)                 # (D, 4H)
    whh_t = jnp.asarray(w_hh.T, jnp.bfloat16)                # (H, 4H), MXU-ready
    b = jnp.asarray((b_ih + b_hh)[None, :], jnp.float32)     # (1, 4H)
    wfc_t = jnp.asarray(w_fc.T, jnp.float32)                 # (H, E)
    bfc = jnp.asarray(b_fc[None, :], jnp.float32)            # (1, E)
    return (wih_t, whh_t, b, wfc_t, bfc)


@jax.jit
def prediction_forward(x, prepared):
    """x: (B, T, D) batch-first, like the PyTorch module. Returns (T, E)."""
    wih_t, whh_t, b, wfc_t, bfc = prepared
    _, T, D = x.shape
    H = whh_t.shape[0]
    H4 = 4 * H
    E = wfc_t.shape[1]

    grid_spec = pltpu.PrefetchScalarGridSpec(
        num_scalar_prefetch=0,
        grid=(1,),
        in_specs=[
            # Squeezed leading dim pinned to block 0 -> only batch element 0's
            # (T, D) tile is DMA'd; no x[0] slice in the wrapper.
            pl.BlockSpec((None, T, D), lambda i: (0, 0, 0)),
            pl.BlockSpec((D, H4), lambda i: (0, 0)),
            pl.BlockSpec((H, H4), lambda i: (0, 0)),
            pl.BlockSpec((1, H4), lambda i: (0, 0)),
            pl.BlockSpec((H, E), lambda i: (0, 0)),
            pl.BlockSpec((1, E), lambda i: (0, 0)),
        ],
        out_specs=pl.BlockSpec((T, E), lambda i: (0, 0)),
    )

    return pl.pallas_call(
        gating_kernel,
        out_shape=jax.ShapeDtypeStruct((T, E), jnp.float32),
        grid_spec=grid_spec,
        compiler_params=pltpu.CompilerParams(
            dimension_semantics=("arbitrary",)),
    )(x, wih_t, whh_t, b, wfc_t, bfc)


def prediction_reference(x, params):
    """Pure-JAX f32 reference matching the PyTorch semantics."""
    w_ih, w_hh, b_ih, b_hh, w_fc, b_fc = params
    B, T, D = x.shape
    H = w_hh.shape[1]
    h = jnp.zeros((B, H), jnp.float32)
    c = jnp.zeros((B, H), jnp.float32)
    hs = []
    for t in range(T):
        gates = x[:, t, :] @ w_ih.T + b_ih + h @ w_hh.T + b_hh
        i = jax.nn.sigmoid(gates[:, :H])
        f = jax.nn.sigmoid(gates[:, H:2 * H])
        g = jnp.tanh(gates[:, 2 * H:3 * H])
        o = jax.nn.sigmoid(gates[:, 3 * H:])
        c = f * c + i * g
        h = o * jnp.tanh(c)
        hs.append(h[0])
    hs = jnp.stack(hs, axis=0)
    logits = hs @ w_fc.T + b_fc
    return jax.nn.softmax(logits, axis=1)


def init_params(key, input_size, hidden_size, num_experts):
    """Deterministic synthetic parameters (LSTM-style uniform init)."""
    ks = jax.random.split(key, 6)
    bound = 1.0 / jnp.sqrt(hidden_size)
    w_ih = jax.random.uniform(ks[0], (4 * hidden_size, input_size),
                              jnp.float32, -bound, bound)
    w_hh = jax.random.uniform(ks[1], (4 * hidden_size, hidden_size),
                              jnp.float32, -bound, bound)
    b_ih = jax.random.uniform(ks[2], (4 * hidden_size,),
                              jnp.float32, -bound, bound)
    b_hh = jax.random.uniform(ks[3], (4 * hidden_size,),
                              jnp.float32, -bound, bound)
    w_fc = jax.random.uniform(ks[4], (num_experts, hidden_size),
                              jnp.float32, -bound, bound)
    b_fc = jax.random.uniform(ks[5], (num_experts,),
                              jnp.float32, -bound, bound)
    return (w_ih, w_hh, b_ih, b_hh, w_fc, b_fc)


if __name__ == "__main__":
    # Small shapes consistent with the module:
    # Gating(input_size=14); shrink hidden to 32 and use 4 experts.
    B, T, D, H, E = 2, 8, 14, 32, 4

    key = jax.random.PRNGKey(0)
    kx, kp = jax.random.split(key)
    x = jax.random.normal(kx, (B, T, D), jnp.float32)
    params = init_params(kp, D, H, E)
    prepared = prepare_params(params)

    out = prediction_forward(x, prepared)
    out = jax.block_until_ready(out)

    ref = prediction_reference(x, params)
    assert out.shape == (T, E)
    # Tolerance covers (a) the bf16 operands of the recurrent h @ W_hh^T matmul
    # and (b) the EUP approximate reciprocal in the in-kernel softmax; output
    # rows therefore sum to 1 only to ~1e-3 relative.
    assert jnp.allclose(out, ref, atol=2e-3, rtol=2e-3), (
        f"max abs diff = {jnp.max(jnp.abs(out - ref))}")

    print("KERNEL_OK")
</pallas_src>

<mosaic_0001>
module attributes {stable_mosaic.version = 11 : i64} {
  func.func @gating_kernel(%arg0: i32, %arg1: memref<1x8x14xf32, #tpu.memory_space<vmem>>, %arg2: memref<14x128xf32, #tpu.memory_space<vmem>>, %arg3: memref<32x128xbf16, #tpu.memory_space<vmem>>, %arg4: memref<1x128xf32, #tpu.memory_space<vmem>>, %arg5: memref<32x4xf32, #tpu.memory_space<vmem>>, %arg6: memref<1x4xf32, #tpu.memory_space<vmem>>, %arg7: memref<8x4xf32, #tpu.memory_space<vmem>>) attributes {dimension_semantics = [#tpu.dimension_semantics<arbitrary>], iteration_bounds = array<i64: 1>, scalar_prefetch = 0 : i64, scratch_operands = 0 : i64, tpu.core_type = #tpu.core_type<tc>, window_params = [{transform_indices = @transform_0, window_bounds = array<i64: 1, 8, 14>}, {pipeline_mode = #tpu.pipeline_mode<synchronous>, transform_indices = @transform_1, window_bounds = array<i64: 14, 128>}, {pipeline_mode = #tpu.pipeline_mode<synchronous>, transform_indices = @transform_2, window_bounds = array<i64: 32, 128>}, {pipeline_mode = #tpu.pipeline_mode<synchronous>, transform_indices = @transform_3, window_bounds = array<i64: 1, 128>}, {pipeline_mode = #tpu.pipeline_mode<synchronous>, transform_indices = @transform_4, window_bounds = array<i64: 32, 4>}, {pipeline_mode = #tpu.pipeline_mode<synchronous>, transform_indices = @transform_5, window_bounds = array<i64: 1, 4>}, {pipeline_mode = #tpu.pipeline_mode<synchronous>, transform_indices = @transform_6, window_bounds = array<i64: 8, 4>}]} {
    %c0 = arith.constant 0 : index
    %c0_0 = arith.constant 0 : index
    %0 = vector.load %arg3[%c0, %c0_0] : memref<32x128xbf16, #tpu.memory_space<vmem>>, vector<32x128xbf16>
    %c0_1 = arith.constant 0 : index
    %c0_2 = arith.constant 0 : index
    %c0_3 = arith.constant 0 : index
    %1 = vector.load %arg1[%c0_1, %c0_2, %c0_3] : memref<1x8x14xf32, #tpu.memory_space<vmem>>, vector<1x8x14xf32>
    %2 = vector.shape_cast %1 : vector<1x8x14xf32> to vector<8x14xf32>
    %c0_4 = arith.constant 0 : index
    %c0_5 = arith.constant 0 : index
    %3 = vector.load %arg2[%c0_4, %c0_5] : memref<14x128xf32, #tpu.memory_space<vmem>>, vector<14x128xf32>
    %cst = arith.constant dense<0.000000e+00> : vector<8x128xf32>
    %4 = tpu.matmul %2, %3, %cst {dimension_numbers = #tpu.dot_dimension_numbers<[1], [0], [0], [1], [0, 0, 1, 1], [], []>} : vector<8x14xf32>, vector<14x128xf32>, vector<8x128xf32> -> vector<8x128xf32>
    %c0_6 = arith.constant 0 : index
    %c0_7 = arith.constant 0 : index
    %5 = vector.load %arg4[%c0_6, %c0_7] : memref<1x128xf32, #tpu.memory_space<vmem>>, vector<1x128xf32>
    %6 = vector.broadcast %5 : vector<1x128xf32> to vector<8x128xf32>
    %7 = arith.addf %4, %6 : vector<8x128xf32>
    %cst_8 = arith.constant 0.000000e+00 : f32
    %8 = vector.broadcast %cst_8 : f32 to vector<1x32xf32>
    %cst_9 = arith.constant 0.000000e+00 : f32
    %9 = vector.broadcast %cst_9 : f32 to vector<1x32xf32>
    %10 = vector.extract_strided_slice %7 {offsets = [0, 0], sizes = [1, 128], strides = [1, 1]} : vector<8x128xf32> to vector<1x128xf32>
    %11 = arith.truncf %8 : vector<1x32xf32> to vector<1x32xbf16>
    %cst_10 = arith.constant dense<0.000000e+00> : vector<1x128xf32>
    %12 = tpu.matmul %11, %0, %cst_10 {dimension_numbers = #tpu.dot_dimension_numbers<[1], [0], [0], [1], [0, 0, 1, 1], [], []>} : vector<1x32xbf16>, vector<32x128xbf16>, vector<1x128xf32> -> vector<1x128xf32>
    %13 = arith.addf %10, %12 : vector<1x128xf32>
    %14 = arith.negf %13 : vector<1x128xf32>
    %15 = math.exp %14 : vector<1x128xf32>
    %cst_11 = arith.constant 1.000000e+00 : f32
    %16 = vector.broadcast %cst_11 : f32 to vector<1x128xf32>
    %17 = arith.addf %16, %15 : vector<1x128xf32>
    %18 = arith.divf %16, %17 : vector<1x128xf32>
    %19 = math.tanh %13 : vector<1x128xf32>
    %20 = vector.extract_strided_slice %18 {offsets = [0, 0], sizes = [1, 32], strides = [1, 1]} : vector<1x128xf32> to vector<1x32xf32>
    %21 = vector.extract_strided_slice %18 {offsets = [0, 32], sizes = [1, 32], strides = [1, 1]} : vector<1x128xf32> to vector<1x32xf32>
    %22 = vector.extract_strided_slice %19 {offsets = [0, 64], sizes = [1, 32], strides = [1, 1]} : vector<1x128xf32> to vector<1x32xf32>
    %23 = vector.extract_strided_slice %18 {offsets = [0, 96], sizes = [1, 32], strides = [1, 1]} : vector<1x128xf32> to vector<1x32xf32>
    %24 = arith.mulf %21, %9 : vector<1x32xf32>
    %25 = arith.mulf %20, %22 : vector<1x32xf32>
    %26 = arith.addf %24, %25 : vector<1x32xf32>
    %27 = math.tanh %26 : vector<1x32xf32>
    %28 = arith.mulf %23, %27 : vector<1x32xf32>
    %29 = vector.extract_strided_slice %7 {offsets = [1, 0], sizes = [1, 128], strides = [1, 1]} : vector<8x128xf32> to vector<1x128xf32>
    %30 = arith.truncf %28 : vector<1x32xf32> to vector<1x32xbf16>
    %cst_12 = arith.constant dense<0.000000e+00> : vector<1x128xf32>
    %31 = tpu.matmul %30, %0, %cst_12 {dimension_numbers = #tpu.dot_dimension_numbers<[1], [0], [0], [1], [0, 0, 1, 1], [], []>} : vector<1x32xbf16>, vector<32x128xbf16>, vector<1x128xf32> -> vector<1x128xf32>
    %32 = arith.addf %29, %31 : vector<1x128xf32>
    %33 = arith.negf %32 : vector<1x128xf32>
    %34 = math.exp %33 : vector<1x128xf32>
    %cst_13 = arith.constant 1.000000e+00 : f32
    %35 = vector.broadcast %cst_13 : f32 to vector<1x128xf32>
    %36 = arith.addf %35, %34 : vector<1x128xf32>
    %37 = arith.divf %35, %36 : vector<1x128xf32>
    %38 = math.tanh %32 : vector<1x128xf32>
    %39 = vector.extract_strided_slice %37 {offsets = [0, 0], sizes = [1, 32], strides = [1, 1]} : vector<1x128xf32> to vector<1x32xf32>
    %40 = vector.extract_strided_slice %37 {offsets = [0, 32], sizes = [1, 32], strides = [1, 1]} : vector<1x128xf32> to vector<1x32xf32>
    %41 = vector.extract_strided_slice %38 {offsets = [0, 64], sizes = [1, 32], strides = [1, 1]} : vector<1x128xf32> to vector<1x32xf32>
    %42 = vector.extract_strided_slice %37 {offsets = [0, 96], sizes = [1, 32], strides = [1, 1]} : vector<1x128xf32> to vector<1x32xf32>
    %43 = arith.mulf %40, %26 : vector<1x32xf32>
    %44 = arith.mulf %39, %41 : vector<1x32xf32>
    %45 = arith.addf %43, %44 : vector<1x32xf32>
    %46 = math.tanh %45 : vector<1x32xf32>
    %47 = arith.mulf %42, %46 : vector<1x32xf32>
    %48 = vector.extract_strided_slice %7 {offsets = [2, 0], sizes = [1, 128], strides = [1, 1]} : vector<8x128xf32> to vector<1x128xf32>
    %49 = arith.truncf %47 : vector<1x32xf32> to vector<1x32xbf16>
    %cst_14 = arith.constant dense<0.000000e+00> : vector<1x128xf32>
    %50 = tpu.matmul %49, %0, %cst_14 {dimension_numbers = #tpu.dot_dimension_numbers<[1], [0], [0], [1], [0, 0, 1, 1], [], []>} : vector<1x32xbf16>, vector<32x128xbf16>, vector<1x128xf32> -> vector<1x128xf32>
    %51 = arith.addf %48, %50 : vector<1x128xf32>
    %52 = arith.negf %51 : vector<1x128xf32>
    %53 = math.exp %52 : vector<1x128xf32>
    %cst_15 = arith.constant 1.000000e+00 : f32
    %54 = vector.broadcast %cst_15 : f32 to vector<1x128xf32>
    %55 = arith.addf %54, %53 : vector<1x128xf32>
    %56 = arith.divf %54, %55 : vector<1x128xf32>
    %57 = math.tanh %51 : vector<1x128xf32>
    %58 = vector.extract_strided_slice %56 {offsets = [0, 0], sizes = [1, 32], strides = [1, 1]} : vector<1x128xf32> to vector<1x32xf32>
    %59 = vector.extract_strided_slice %56 {offsets = [0, 32], sizes = [1, 32], strides = [1, 1]} : vector<1x128xf32> to vector<1x32xf32>
    %60 = vector.extract_strided_slice %57 {offsets = [0, 64], sizes = [1, 32], strides = [1, 1]} : vector<1x128xf32> to vector<1x32xf32>
    %61 = vector.extract_strided_slice %56 {offsets = [0, 96], sizes = [1, 32], strides = [1, 1]} : vector<1x128xf32> to vector<1x32xf32>
    %62 = arith.mulf %59, %45 : vector<1x32xf32>
    %63 = arith.mulf %58, %60 : vector<1x32xf32>
    %64 = arith.addf %62, %63 : vector<1x32xf32>
    %65 = math.tanh %64 : vector<1x32xf32>
    %66 = arith.mulf %61, %65 : vector<1x32xf32>
    %67 = vector.extract_strided_slice %7 {offsets = [3, 0], sizes = [1, 128], strides = [1, 1]} : vector<8x128xf32> to vector<1x128xf32>
    %68 = arith.truncf %66 : vector<1x32xf32> to vector<1x32xbf16>
    %cst_16 = arith.constant dense<0.000000e+00> : vector<1x128xf32>
    %69 = tpu.matmul %68, %0, %cst_16 {dimension_numbers = #tpu.dot_dimension_numbers<[1], [0], [0], [1], [0, 0, 1, 1], [], []>} : vector<1x32xbf16>, vector<32x128xbf16>, vector<1x128xf32> -> vector<1x128xf32>
    %70 = arith.addf %67, %69 : vector<1x128xf32>
    %71 = arith.negf %70 : vector<1x128xf32>
    %72 = math.exp %71 : vector<1x128xf32>
    %cst_17 = arith.constant 1.000000e+00 : f32
    %73 = vector.broadcast %cst_17 : f32 to vector<1x128xf32>
    %74 = arith.addf %73, %72 : vector<1x128xf32>
    %75 = arith.divf %73, %74 : vector<1x128xf32>
    %76 = math.tanh %70 : vector<1x128xf32>
    %77 = vector.extract_strided_slice %75 {offsets = [0, 0], sizes = [1, 32], strides = [1, 1]} : vector<1x128xf32> to vector<1x32xf32>
    %78 = vector.extract_strided_slice %75 {offsets = [0, 32], sizes = [1, 32], strides = [1, 1]} : vector<1x128xf32> to vector<1x32xf32>
    %79 = vector.extract_strided_slice %76 {offsets = [0, 64], sizes = [1, 32], strides = [1, 1]} : vector<1x128xf32> to vector<1x32xf32>
    %80 = vector.extract_strided_slice %75 {offsets = [0, 96], sizes = [1, 32], strides = [1, 1]} : vector<1x128xf32> to vector<1x32xf32>
    %81 = arith.mulf %78, %64 : vector<1x32xf32>
    %82 = arith.mulf %77, %79 : vector<1x32xf32>
    %83 = arith.addf %81, %82 : vector<1x32xf32>
    %84 = math.tanh %83 : vector<1x32xf32>
    %85 = arith.mulf %80, %84 : vector<1x32xf32>
    %86 = vector.extract_strided_slice %7 {offsets = [4, 0], sizes = [1, 128], strides = [1, 1]} : vector<8x128xf32> to vector<1x128xf32>
    %87 = arith.truncf %85 : vector<1x32xf32> to vector<1x32xbf16>
    %cst_18 = arith.constant dense<0.000000e+00> : vector<1x128xf32>
    %88 = tpu.matmul %87, %0, %cst_18 {dimension_numbers = #tpu.dot_dimension_numbers<[1], [0], [0], [1], [0, 0, 1, 1], [], []>} : vector<1x32xbf16>, vector<32x128xbf16>, vector<1x128xf32> -> vector<1x128xf32>
    %89 = arith.addf %86, %88 : vector<1x128xf32>
    %90 = arith.negf %89 : vector<1x128xf32>
    %91 = math.exp %90 : vector<1x128xf32>
    %cst_19 = arith.constant 1.000000e+00 : f32
    %92 = vector.broadcast %cst_19 : f32 to vector<1x128xf32>
    %93 = arith.addf %92, %91 : vector<1x128xf32>
    %94 = arith.divf %92, %93 : vector<1x128xf32>
    %95 = math.tanh %89 : vector<1x128xf32>
    %96 = vector.extract_strided_slice %94 {offsets = [0, 0], sizes = [1, 32], strides = [1, 1]} : vector<1x128xf32> to vector<1x32xf32>
    %97 = vector.extract_strided_slice %94 {offsets = [0, 32], sizes = [1, 32], strides = [1, 1]} : vector<1x128xf32> to vector<1x32xf32>
    %98 = vector.extract_strided_slice %95 {offsets = [0, 64], sizes = [1, 32], strides = [1, 1]} : vector<1x128xf32> to vector<1x32xf32>
    %99 = vector.extract_strided_slice %94 {offsets = [0, 96], sizes = [1, 32], strides = [1, 1]} : vector<1x128xf32> to vector<1x32xf32>
    %100 = arith.mulf %97, %83 : vector<1x32xf32>
    %101 = arith.mulf %96, %98 : vector<1x32xf32>
    %102 = arith.addf %100, %101 : vector<1x32xf32>
    %103 = math.tanh %102 : vector<1x32xf32>
    %104 = arith.mulf %99, %103 : vector<1x32xf32>
    %105 = vector.extract_strided_slice %7 {offsets = [5, 0], sizes = [1, 128], strides = [1, 1]} : vector<8x128xf32> to vector<1x128xf32>
    %106 = arith.truncf %104 : vector<1x32xf32> to vector<1x32xbf16>
    %cst_20 = arith.constant dense<0.000000e+00> : vector<1x128xf32>
    %107 = tpu.matmul %106, %0, %cst_20 {dimension_numbers = #tpu.dot_dimension_numbers<[1], [0], [0], [1], [0, 0, 1, 1], [], []>} : vector<1x32xbf16>, vector<32x128xbf16>, vector<1x128xf32> -> vector<1x128xf32>
    %108 = arith.addf %105, %107 : vector<1x128xf32>
    %109 = arith.negf %108 : vector<1x128xf32>
    %110 = math.exp %109 : vector<1x128xf32>
    %cst_21 = arith.constant 1.000000e+00 : f32
    %111 = vector.broadcast %cst_21 : f32 to vector<1x128xf32>
    %112 = arith.addf %111, %110 : vector<1x128xf32>
    %113 = arith.divf %111, %112 : vector<1x128xf32>
    %114 = math.tanh %108 : vector<1x128xf32>
    %115 = vector.extract_strided_slice %113 {offsets = [0, 0], sizes = [1, 32], strides = [1, 1]} : vector<1x128xf32> to vector<1x32xf32>
    %116 = vector.extract_strided_slice %113 {offsets = [0, 32], sizes = [1, 32], strides = [1, 1]} : vector<1x128xf32> to vector<1x32xf32>
    %117 = vector.extract_strided_slice %114 {offsets = [0, 64], sizes = [1, 32], strides = [1, 1]} : vector<1x128xf32> to vector<1x32xf32>
    %118 = vector.extract_strided_slice %113 {offsets = [0, 96], sizes = [1, 32], strides = [1, 1]} : vector<1x128xf32> to vector<1x32xf32>
    %119 = arith.mulf %116, %102 : vector<1x32xf32>
    %120 = arith.mulf %115, %117 : vector<1x32xf32>
    %121 = arith.addf %119, %120 : vector<1x32xf32>
    %122 = math.tanh %121 : vector<1x32xf32>
    %123 = arith.mulf %118, %122 : vector<1x32xf32>
    %124 = vector.extract_strided_slice %7 {offsets = [6, 0], sizes = [1, 128], strides = [1, 1]} : vector<8x128xf32> to vector<1x128xf32>
    %125 = arith.truncf %123 : vector<1x32xf32> to vector<1x32xbf16>
    %cst_22 = arith.constant dense<0.000000e+00> : vector<1x128xf32>
    %126 = tpu.matmul %125, %0, %cst_22 {dimension_numbers = #tpu.dot_dimension_numbers<[1], [0], [0], [1], [0, 0, 1, 1], [], []>} : vector<1x32xbf16>, vector<32x128xbf16>, vector<1x128xf32> -> vector<1x128xf32>
    %127 = arith.addf %124, %126 : vector<1x128xf32>
    %128 = arith.negf %127 : vector<1x128xf32>
    %129 = math.exp %128 : vector<1x128xf32>
    %cst_23 = arith.constant 1.000000e+00 : f32
    %130 = vector.broadcast %cst_23 : f32 to vector<1x128xf32>
    %131 = arith.addf %130, %129 : vector<1x128xf32>
    %132 = arith.divf %130, %131 : vector<1x128xf32>
    %133 = math.tanh %127 : vector<1x128xf32>
    %134 = vector.extract_strided_slice %132 {offsets = [0, 0], sizes = [1, 32], strides = [1, 1]} : vector<1x128xf32> to vector<1x32xf32>
    %135 = vector.extract_strided_slice %132 {offsets = [0, 32], sizes = [1, 32], strides = [1, 1]} : vector<1x128xf32> to vector<1x32xf32>
    %136 = vector.extract_strided_slice %133 {offsets = [0, 64], sizes = [1, 32], strides = [1, 1]} : vector<1x128xf32> to vector<1x32xf32>
    %137 = vector.extract_strided_slice %132 {offsets = [0, 96], sizes = [1, 32], strides = [1, 1]} : vector<1x128xf32> to vector<1x32xf32>
    %138 = arith.mulf %135, %121 : vector<1x32xf32>
    %139 = arith.mulf %134, %136 : vector<1x32xf32>
    %140 = arith.addf %138, %139 : vector<1x32xf32>
    %141 = math.tanh %140 : vector<1x32xf32>
    %142 = arith.mulf %137, %141 : vector<1x32xf32>
    %143 = vector.extract_strided_slice %7 {offsets = [7, 0], sizes = [1, 128], strides = [1, 1]} : vector<8x128xf32> to vector<1x128xf32>
    %144 = arith.truncf %142 : vector<1x32xf32> to vector<1x32xbf16>
    %cst_24 = arith.constant dense<0.000000e+00> : vector<1x128xf32>
    %145 = tpu.matmul %144, %0, %cst_24 {dimension_numbers = #tpu.dot_dimension_numbers<[1], [0], [0], [1], [0, 0, 1, 1], [], []>} : vector<1x32xbf16>, vector<32x128xbf16>, vector<1x128xf32> -> vector<1x128xf32>
    %146 = arith.addf %143, %145 : vector<1x128xf32>
    %147 = arith.negf %146 : vector<1x128xf32>
    %148 = math.exp %147 : vector<1x128xf32>
    %cst_25 = arith.constant 1.000000e+00 : f32
    %149 = vector.broadcast %cst_25 : f32 to vector<1x128xf32>
    %150 = arith.addf %149, %148 : vector<1x128xf32>
    %151 = arith.divf %149, %150 : vector<1x128xf32>
    %152 = math.tanh %146 : vector<1x128xf32>
    %153 = vector.extract_strided_slice %151 {offsets = [0, 0], sizes = [1, 32], strides = [1, 1]} : vector<1x128xf32> to vector<1x32xf32>
    %154 = vector.extract_strided_slice %151 {offsets = [0, 32], sizes = [1, 32], strides = [1, 1]} : vector<1x128xf32> to vector<1x32xf32>
    %155 = vector.extract_strided_slice %152 {offsets = [0, 64], sizes = [1, 32], strides = [1, 1]} : vector<1x128xf32> to vector<1x32xf32>
    %156 = vector.extract_strided_slice %151 {offsets = [0, 96], sizes = [1, 32], strides = [1, 1]} : vector<1x128xf32> to vector<1x32xf32>
    %157 = arith.mulf %154, %140 : vector<1x32xf32>
    %158 = arith.mulf %153, %155 : vector<1x32xf32>
    %159 = arith.addf %157, %158 : vector<1x32xf32>
    %160 = math.tanh %159 : vector<1x32xf32>
    %161 = arith.mulf %156, %160 : vector<1x32xf32>
    %162 = tpu.concatenate %28, %47, %66, %85, %104, %123, %142, %161 in 0 : vector<1x32xf32>, vector<1x32xf32>, vector<1x32xf32>, vector<1x32xf32>, vector<1x32xf32>, vector<1x32xf32>, vector<1x32xf32>, vector<1x32xf32> -> vector<8x32xf32>
    %c0_26 = arith.constant 0 : index
    %c0_27 = arith.constant 0 : index
    %163 = vector.load %arg5[%c0_26, %c0_27] : memref<32x4xf32, #tpu.memory_space<vmem>>, vector<32x4xf32>
    %cst_28 = arith.constant dense<0.000000e+00> : vector<8x4xf32>
    %164 = tpu.matmul %162, %163, %cst_28 {dimension_numbers = #tpu.dot_dimension_numbers<[1], [0], [0], [1], [0, 0, 1, 1], [], []>} : vector<8x32xf32>, vector<32x4xf32>, vector<8x4xf32> -> vector<8x4xf32>
    %c0_29 = arith.constant 0 : index
    %c0_30 = arith.constant 0 : index
    %165 = vector.load %arg6[%c0_29, %c0_30] : memref<1x4xf32, #tpu.memory_space<vmem>>, vector<1x4xf32>
    %166 = vector.broadcast %165 : vector<1x4xf32> to vector<8x4xf32>
    %167 = arith.addf %164, %166 : vector<8x4xf32>
    %cst_31 = arith.constant dense<0xFF800000> : vector<8xf32>
    %168 = vector.multi_reduction <maximumf>, %167, %cst_31 [1] : vector<8x4xf32> to vector<8xf32>
    %169 = vector.shape_cast %168 : vector<8xf32> to vector<8x1xf32>
    %170 = vector.broadcast %169 : vector<8x1xf32> to vector<8x4xf32>
    %171 = arith.subf %167, %170 : vector<8x4xf32>
    %172 = math.exp %171 : vector<8x4xf32>
    %cst_32 = arith.constant dense<0.000000e+00> : vector<8xf32>
    %173 = vector.multi_reduction <add>, %172, %cst_32 [1] : vector<8x4xf32> to vector<8xf32>
    %174 = vector.shape_cast %173 : vector<8xf32> to vector<8x1xf32>
    %175 = tpu.reciprocal %174 {approx = true} : vector<8x1xf32> -> vector<8x1xf32>
    %176 = vector.broadcast %175 : vector<8x1xf32> to vector<8x4xf32>
    %177 = arith.mulf %172, %176 : vector<8x4xf32>
    %c0_33 = arith.constant 0 : index
    %c0_34 = arith.constant 0 : index
    %178 = vector.load %arg7[%c0_33, %c0_34] : memref<8x4xf32, #tpu.memory_space<vmem>>, vector<8x4xf32>
    tpu.vector_store %arg7[%c0_33, %c0_34], %177 {strides = array<i32>} : memref<8x4xf32, #tpu.memory_space<vmem>>, vector<8x4xf32>,
    return
  }
  func.func @transform_0(%arg0: i32) -> (i32, i32, i32) {
    %c0_i32 = arith.constant 0 : i32
    %c0_i32_0 = arith.constant 0 : i32
    %c0_i32_1 = arith.constant 0 : i32
    %c0_i32_2 = arith.constant 0 : i32
    return %c0_i32, %c0_i32_0, %c0_i32_1 : i32, i32, i32
  }
  func.func @transform_1(%arg0: i32) -> (i32, i32) {
    %c0_i32 = arith.constant 0 : i32
    %c0_i32_0 = arith.constant 0 : i32
    %c0_i32_1 = arith.constant 0 : i32
    return %c0_i32, %c0_i32_0 : i32, i32
  }
  func.func @transform_2(%arg0: i32) -> (i32, i32) {
    %c0_i32 = arith.constant 0 : i32
    %c0_i32_0 = arith.constant 0 : i32
    %c0_i32_1 = arith.constant 0 : i32
    return %c0_i32, %c0_i32_0 : i32, i32
  }
  func.func @transform_3(%arg0: i32) -> (i32, i32) {
    %c0_i32 = arith.constant 0 : i32
    %c0_i32_0 = arith.constant 0 : i32
    %c0_i32_1 = arith.constant 0 : i32
    return %c0_i32, %c0_i32_0 : i32, i32
  }
  func.func @transform_4(%arg0: i32) -> (i32, i32) {
    %c0_i32 = arith.constant 0 : i32
    %c0_i32_0 = arith.constant 0 : i32
    %c0_i32_1 = arith.constant 0 : i32
    return %c0_i32, %c0_i32_0 : i32, i32
  }
  func.func @transform_5(%arg0: i32) -> (i32, i32) {
    %c0_i32 = arith.constant 0 : i32
    %c0_i32_0 = arith.constant 0 : i32
    %c0_i32_1 = arith.constant 0 : i32
    return %c0_i32, %c0_i32_0 : i32, i32
  }
  func.func @transform_6(%arg0: i32) -> (i32, i32) {
    %c0_i32 = arith.constant 0 : i32
    %c0_i32_0 = arith.constant 0 : i32
    %c0_i32_1 = arith.constant 0 : i32
    return %c0_i32, %c0_i32_0 : i32, i32
  }
}

</mosaic_0001>

<llo_original>
// kernel: prediction_forward.1
$region0: #{prediction_forward.1}
  #allocation0 [shape = 'u32[]', space=smem, size = 0x4, offset = 0x4, fixed_abs, tag = 'smem constant byte address 0x4 - core index']
  #allocation1 [shape = 'u32[72,128]{1,0:T(1,128)}', space=vmem, size = 0x9000, scoped, tag = 'internal scratch']
  %s0 = inlined_call_operand.vmem [shape: f32[2,8,14], index: 0, kind: input, shape index: {}]
  %s1 = inlined_call_operand.vmem [shape: f32[14,128], index: 1, kind: input, shape index: {}]
  %s2 = inlined_call_operand.hbm [shape: bf16[32,128], index: 2, kind: input, shape index: {}]
  %s3 = inlined_call_operand.vmem [shape: f32[1,128], index: 3, kind: input, shape index: {}]
  %s4 = inlined_call_operand.vmem [shape: f32[32,4], index: 4, kind: input, shape index: {}]
  %s5 = inlined_call_operand.vmem [shape: f32[1,4], index: 5, kind: input, shape index: {}]
  %s6 = inlined_call_operand.vmem [shape: f32[8,4], index: 6, kind: output, shape index: {}]
  %s7 = sld [smem:[#allocation0]]
  $region38: #{prediction_forward.1} parent=0
    _
  %s9 = ssub.s32 1, %s7
  %s10 = scalar_select 0, %s9, %s7
  $region1: #{prediction_forward.1} parent=0
    #allocation2 [shape = 'u8[8192]{0}', space=vmem, size = 0x2000, scoped, tag = 'input window, operand 2, single buffered']
    #allocation3 [shape = 's32[1]{0}', space=sflag, size = 0x4, scoped, tag = 'scoped memory for prediction_forward.1']
    %11 = vsyncpa [#allocation3], 0
    // Predicated region
    $region2: #{prediction_forward.1} parent=1 // pred_check
      _
    $region3: #{prediction_forward.1} parent=1 // pred_check_branch
      %13 = sbr.rel (0) target = $region5
    $region4: #{prediction_forward.1} parent=1 // pred_region
      _
    $region5: #{prediction_forward.1} parent=1 // pred_fallthru
      _
    // Predicated region
    $region6: #{prediction_forward.1} parent=1 // pred_check
      _
    $region7: #{prediction_forward.1} parent=1 // pred_check_branch
      %15 = sbr.rel (0) target = $region9
    $region8: #{prediction_forward.1} parent=1 // pred_region
      _
    $region9: #{prediction_forward.1} parent=1 // pred_fallthru
      _
    // Predicated region
    $region10: #{prediction_forward.1} parent=1 // pred_check
      _
    $region11: #{prediction_forward.1} parent=1 // pred_check_branch
      %17 = sbr.rel (0) target = $region13
    $region12: #{prediction_forward.1} parent=1 // pred_region
      %19 = vsyncadd [#allocation3], 0
      %s20 = sshll.u32 %s2, 4
      %s21 = int_to_ptr.hbm [resolvable:$true] %s20
      %s22 = sshll.u32 [#allocation2], 4
      %s23 = int_to_ptr.vmem [resolvable:$true] %s22
      %28 = dma.hbm_to_vmem [thread:$0]  %s21, 256, %s23, [#allocation3], 64, 64, 4
    $region13: #{prediction_forward.1} parent=1 // pred_fallthru
      _
    // Predicated region
    $region14: #{prediction_forward.1} parent=1 // pred_check
      _
    $region15: #{prediction_forward.1} parent=1 // pred_check_branch
      %30 = sbr.rel (0) target = $region17
    $region16: #{prediction_forward.1} parent=1 // pred_region
      _
    $region17: #{prediction_forward.1} parent=1 // pred_fallthru
      _
    // Predicated region
    $region18: #{prediction_forward.1} parent=1 // pred_check
      _
    $region19: #{prediction_forward.1} parent=1 // pred_check_branch
      %32 = sbr.rel (0) target = $region21
    $region20: #{prediction_forward.1} parent=1 // pred_region
      _
    $region21: #{prediction_forward.1} parent=1 // pred_fallthru
      _
    // Predicated region
    $region22: #{prediction_forward.1} parent=1 // pred_check
      _
    $region23: #{prediction_forward.1} parent=1 // pred_check_branch
      %34 = sbr.rel (0) target = $region25
    $region24: #{prediction_forward.1} parent=1 // pred_region
      _
    $region25: #{prediction_forward.1} parent=1 // pred_fallthru
      _
    // Predicated region
    $region26: #{prediction_forward.1} parent=1 // pred_check
      _
    $region27: #{prediction_forward.1} parent=1 // pred_check_branch
      %36 = sbr.rel (0) target = $region29
    $region28: #{prediction_forward.1} parent=1 // pred_region
      %38 = dma.done [#allocation3], 256
    $region29: #{prediction_forward.1} parent=1 // pred_fallthru
      _
    %v40 = vld [vmem:[#allocation2] sm:$0xf]
    %v41 = vld [vmem:[#allocation2 + $0x4] sm:$0xf]
    %v42 = vld [vmem:[#allocation2 + $0x8] sm:$0xf]
    %v43 = vld [vmem:[#allocation2 + $0xc] sm:$0xf]
    %v44 = vld [vmem:[%s0] sm:$0xff]
    %v45 = vld [vmem:[%s1] sm:$0xff]
    %v46 = vld [vmem:[%s1 + $0x8] sm:$0x3f]
    %v47 = vld [vmem:[%s3] sm:$0x1]
    %v49 = vperm.slane %v47, 0
    %vm51 = vcmask 113664
    %v53 = vsel %vm51, %v44, 0
    %vm55 = vcmask 1045504
    %v57 = vsel %vm55, %v46, 0
    %59 = vmatpush.msra.mxu0 0.0
    %60 = vmatpush.msra.mxu0 0.0
    %61 = vmatpush.msra.mxu0 0.0
    %62 = vmatpush.msra.mxu0 0.0
    %63 = vmatpush.msra.mxu0 0.0
    %64 = vmatpush.msra.mxu0 0.0
    %65 = vmatpush.msra.mxu0 0.0
    %66 = vmatpush.msra.mxu0 0.0
    %67 = vmatpush.msra.mxu0 0.0
    %68 = vmatpush.msra.mxu0 0.0
    %69 = vmatpush.msra.mxu0 0.0
    %70 = vmatpush.msra.mxu0 0.0
    %71 = vmatpush.msra.mxu0 0.0
    %72 = vmatpush.msra.mxu0 0.0
    %73 = vmatpush.msra.mxu0 %v57
    %74 = vmatpush.msra.mxu0 %v45
    %75 = vmatmul.f32.gmra.mxu0 %v53
    %v76 = vpop.f32.mrf.mxu0
    %v77 = vadd.f32 %v49, %v76
    %78 = vdwg.mxu0
    %v83 = vunpack.c.l.b16 %v40
    %v84 = vunpack.c.l.b16 %v41
    %v85 = vunpack.c.l.b16 %v42
    %v86 = vunpack.c.l.b16 %v43
    %v87 = vpack.c.b16 %v84, %v83
    %v88 = vpack.c.b16 %v86, %v85
    %vm91 = vcmask 261120
    %v93 = vsel %vm91, 0, 0
    %95 = vmatpush.bf16.msra.mxu0 0
    %96 = vmatpush.bf16.msra.mxu0 0
    %97 = vmatpush.bf16.msra.mxu0 0
    %98 = vmatpush.bf16.msra.mxu0 0
    %99 = vmatpush.bf16.msra.mxu0 0
    %100 = vmatpush.bf16.msra.mxu0 0
    %101 = vmatpush.bf16.msra.mxu0 %v88
    %102 = vmatpush.bf16.msra.mxu0 %v87
    %103 = vmatmul.bf16.gmra.mxu0 %v93
    %v104 = vpop.f32.mrf.mxu0
    %v105 = vadd.f32 0.0, %v104
    %v106 = vpop.f32.mrf.mxu0
    %107 = vdwg.mxu0
    %v108 = vadd.f32 %v77, %v105
    %v109 = vxor.u32 %v108, 2147483648
    %v110 = vmul.f32 %v109, 1.442695
    %v111 = vpow.pop %v110
    %v112 = vadd.f32 %v111, 1.0
    %v113 = vrcp.pop %v112
    %v114 = vmul.f32 %v112, %v113
    %v115 = vsub.f32 1.0, %v114
    %v116 = vmul.f32 %v113, %v115
    %v117 = vadd.f32 %v113, %v116
    %vm118 = vweird.f32 %v112
    %vm119 = vweird.f32 %v113
    %vm120 = vmor %vm118, %vm119
    %v121 = vsel %vm120, %v113, %v117
    %v122 = vand.u32 2147483647, %v112
    %vm123 = vcmp.eq.f32.partialorder %v122, 8.507059e+37
    %v124 = vand.u32 %v112, 2147483648
    %v125 = vor.u32 1.1754944e-38, %v124
    %v126 = vsel %vm123, %v125, %v121
    %v127 = vmul.f32 1.0, %v126
    %v128 = vtanh.pop %v108
    %v129 = vmul.f32 %v127, 0.0
    %131 = vrot.lane.b32.xlu0 %v128, 64
    %v132 = vpop.permute.xlu0 %131
    %v134 = vmul.f32 %v127, %v132
    %136 = vrot.lane.b32.xlu0 %v134, 32
    %v137 = vpop.permute.xlu0 %136
    %v139 = vadd.f32 %v129, %v137
    %v140 = vtanh.pop %v139
    %142 = vrot.lane.b32.xlu0 %v140, 64
    %v143 = vpop.permute.xlu0 %142
    %v145 = vmul.f32 %v127, %v143
    %v146 = vpack.c.bf16 %v145, %v145
    %148 = vrot.lane.b32.xlu0 %v146, 32
    %v149 = vpop.permute.xlu0 %148
    %v151 = vsel %vm91, %v149, 0
    %153 = vmatpush.bf16.msra.mxu0 0
    %154 = vmatpush.bf16.msra.mxu0 0
    %155 = vmatpush.bf16.msra.mxu0 0
    %156 = vmatpush.bf16.msra.mxu0 0
    %157 = vmatpush.bf16.msra.mxu0 0
    %158 = vmatpush.bf16.msra.mxu0 0
    %159 = vmatpush.bf16.msra.mxu0 %v88
    %160 = vmatpush.bf16.msra.mxu0 %v87
    %161 = vmatmul.bf16.gmra.mxu0 %v151
    %v162 = vpop.f32.mrf.mxu0
    %v163 = vadd.f32 0.0, %v162
    %v164 = vpop.f32.mrf.mxu0
    %165 = vdwg.mxu0
    %v167 = vrot.slane %v163, 7
    %v169 = vadd.f32 %v77, %v167
    %v170 = vxor.u32 %v169, 2147483648
    %v171 = vmul.f32 %v170, 1.442695
    %v172 = vpow.pop %v171
    %v173 = vadd.f32 %v172, 1.0
    %v174 = vrcp.pop %v173
    %v175 = vmul.f32 %v173, %v174
    %v176 = vsub.f32 1.0, %v175
    %v177 = vmul.f32 %v174, %v176
    %v178 = vadd.f32 %v174, %v177
    %vm179 = vweird.f32 %v173
    %vm180 = vweird.f32 %v174
    %vm181 = vmor %vm179, %vm180
    %v182 = vsel %vm181, %v174, %v178
    %v183 = vand.u32 2147483647, %v173
    %vm184 = vcmp.eq.f32.partialorder %v183, 8.507059e+37
    %v185 = vand.u32 %v173, 2147483648
    %v186 = vor.u32 1.1754944e-38, %v185
    %v187 = vsel %vm184, %v186, %v182
    %v188 = vmul.f32 1.0, %v187
    %v189 = vtanh.pop %v169
    %v191 = vrot.slane %v139, 7
    %v193 = vmul.f32 %v188, %v191
    %195 = vrot.lane.b32.xlu0 %v189, 64
    %v196 = vpop.permute.xlu0 %195
    %v198 = vmul.f32 %v188, %v196
    %200 = vrot.lane.b32.xlu0 %v198, 32
    %v201 = vpop.permute.xlu0 %200
    %v203 = vadd.f32 %v193, %v201
    %v204 = vtanh.pop %v203
    %206 = vrot.lane.b32.xlu0 %v204, 64
    %v207 = vpop.permute.xlu0 %206
    %v209 = vmul.f32 %v188, %v207
    %v210 = vpack.c.bf16 %v209, %v209
    %v212 = vshrl.u32 %v210, 16
    %214 = vrot.lane.b32.xlu0 %v212, 32
    %v215 = vpop.permute.xlu0 %214
    %v217 = vsel %vm91, %v215, 0
    %219 = vmatpush.bf16.msra.mxu0 0
    %220 = vmatpush.bf16.msra.mxu0 0
    %221 = vmatpush.bf16.msra.mxu0 0
    %222 = vmatpush.bf16.msra.mxu0 0
    %223 = vmatpush.bf16.msra.mxu0 0
    %224 = vmatpush.bf16.msra.mxu0 0
    %225 = vmatpush.bf16.msra.mxu0 %v88
    %226 = vmatpush.bf16.msra.mxu0 %v87
    %227 = vmatmul.bf16.gmra.mxu0 %v217
    %v228 = vpop.f32.mrf.mxu0
    %v229 = vadd.f32 0.0, %v228
    %v230 = vpop.f32.mrf.mxu0
    %231 = vdwg.mxu0
    %v233 = vrot.slane %v229, 6
    %v235 = vadd.f32 %v77, %v233
    %v236 = vxor.u32 %v235, 2147483648
    %v237 = vmul.f32 %v236, 1.442695
    %v238 = vpow.pop %v237
    %v239 = vadd.f32 %v238, 1.0
    %v240 = vrcp.pop %v239
    %v241 = vmul.f32 %v239, %v240
    %v242 = vsub.f32 1.0, %v241
    %v243 = vmul.f32 %v240, %v242
    %v244 = vadd.f32 %v240, %v243
    %vm245 = vweird.f32 %v239
    %vm246 = vweird.f32 %v240
    %vm247 = vmor %vm245, %vm246
    %v248 = vsel %vm247, %v240, %v244
    %v249 = vand.u32 2147483647, %v239
    %vm250 = vcmp.eq.f32.partialorder %v249, 8.507059e+37
    %v251 = vand.u32 %v239, 2147483648
    %v252 = vor.u32 1.1754944e-38, %v251
    %v253 = vsel %vm250, %v252, %v248
    %v254 = vmul.f32 1.0, %v253
    %v255 = vtanh.pop %v235
    %v257 = vrot.slane %v203, 7
    %v259 = vmul.f32 %v254, %v257
    %261 = vrot.lane.b32.xlu0 %v255, 64
    %v262 = vpop.permute.xlu0 %261
    %v264 = vmul.f32 %v254, %v262
    %266 = vrot.lane.b32.xlu0 %v264, 32
    %v267 = vpop.permute.xlu0 %266
    %v269 = vadd.f32 %v259, %v267
    %v270 = vtanh.pop %v269
    %272 = vrot.lane.b32.xlu0 %v270, 64
    %v273 = vpop.permute.xlu0 %272
    %v275 = vmul.f32 %v254, %v273
    %v276 = vpack.c.bf16 %v275, %v275
    %v278 = vrot.slane %v276, 1
    %279 = vrot.lane.b32.xlu0 %v278, 32
    %v280 = vpop.permute.xlu0 %279
    %v282 = vsel %vm91, %v280, 0
    %284 = vmatpush.bf16.msra.mxu0 0
    %285 = vmatpush.bf16.msra.mxu0 0
    %286 = vmatpush.bf16.msra.mxu0 0
    %287 = vmatpush.bf16.msra.mxu0 0
    %288 = vmatpush.bf16.msra.mxu0 0
    %289 = vmatpush.bf16.msra.mxu0 0
    %290 = vmatpush.bf16.msra.mxu0 %v88
    %291 = vmatpush.bf16.msra.mxu0 %v87
    %292 = vmatmul.bf16.gmra.mxu0 %v282
    %v293 = vpop.f32.mrf.mxu0
    %v294 = vadd.f32 0.0, %v293
    %v295 = vpop.f32.mrf.mxu0
    %296 = vdwg.mxu0
    %v298 = vrot.slane %v294, 5
    %v300 = vadd.f32 %v77, %v298
    %v301 = vxor.u32 %v300, 2147483648
    %v302 = vmul.f32 %v301, 1.442695
    %v303 = vpow.pop %v302
    %v304 = vadd.f32 %v303, 1.0
    %v305 = vrcp.pop %v304
    %v306 = vmul.f32 %v304, %v305
    %v307 = vsub.f32 1.0, %v306
    %v308 = vmul.f32 %v305, %v307
    %v309 = vadd.f32 %v305, %v308
    %vm310 = vweird.f32 %v304
    %vm311 = vweird.f32 %v305
    %vm312 = vmor %vm310, %vm311
    %v313 = vsel %vm312, %v305, %v309
    %v314 = vand.u32 2147483647, %v304
    %vm315 = vcmp.eq.f32.partialorder %v314, 8.507059e+37
    %v316 = vand.u32 %v304, 2147483648
    %v317 = vor.u32 1.1754944e-38, %v316
    %v318 = vsel %vm315, %v317, %v313
    %v319 = vmul.f32 1.0, %v318
    %v320 = vtanh.pop %v300
    %v322 = vrot.slane %v269, 7
    %v324 = vmul.f32 %v319, %v322
    %326 = vrot.lane.b32.xlu0 %v320, 64
    %v327 = vpop.permute.xlu0 %326
    %v329 = vmul.f32 %v319, %v327
    %331 = vrot.lane.b32.xlu0 %v329, 32
    %v332 = vpop.permute.xlu0 %331
    %v334 = vadd.f32 %v324, %v332
    %v335 = vtanh.pop %v334
    %337 = vrot.lane.b32.xlu0 %v335, 64
    %v338 = vpop.permute.xlu0 %337
    %v340 = vmul.f32 %v319, %v338
    %v341 = vpack.c.bf16 %v340, %v340
    %v343 = vshrl.u32 %v341, 16
    %v345 = vrot.slane %v343, 1
    %346 = vrot.lane.b32.xlu0 %v345, 32
    %v347 = vpop.permute.xlu0 %346
    %v349 = vsel %vm91, %v347, 0
    %351 = vmatpush.bf16.msra.mxu0 0
    %352 = vmatpush.bf16.msra.mxu0 0
    %353 = vmatpush.bf16.msra.mxu0 0
    %354 = vmatpush.bf16.msra.mxu0 0
    %355 = vmatpush.bf16.msra.mxu0 0
    %356 = vmatpush.bf16.msra.mxu0 0
    %357 = vmatpush.bf16.msra.mxu0 %v88
    %358 = vmatpush.bf16.msra.mxu0 %v87
    %359 = vmatmul.bf16.gmra.mxu0 %v349
    %v360 = vpop.f32.mrf.mxu0
    %v361 = vadd.f32 0.0, %v360
    %v362 = vpop.f32.mrf.mxu0
    %363 = vdwg.mxu0
    %v365 = vrot.slane %v361, 4
    %v367 = vadd.f32 %v77, %v365
    %v368 = vxor.u32 %v367, 2147483648
    %v369 = vmul.f32 %v368, 1.442695
    %v370 = vpow.pop %v369
    %v371 = vadd.f32 %v370, 1.0
    %v372 = vrcp.pop %v371
    %v373 = vmul.f32 %v371, %v372
    %v374 = vsub.f32 1.0, %v373
    %v375 = vmul.f32 %v372, %v374
    %v376 = vadd.f32 %v372, %v375
    %vm377 = vweird.f32 %v371
    %vm378 = vweird.f32 %v372
    %vm379 = vmor %vm377, %vm378
    %v380 = vsel %vm379, %v372, %v376
    %v381 = vand.u32 2147483647, %v371
    %vm382 = vcmp.eq.f32.partialorder %v381, 8.507059e+37
    %v383 = vand.u32 %v371, 2147483648
    %v384 = vor.u32 1.1754944e-38, %v383
    %v385 = vsel %vm382, %v384, %v380
    %v386 = vmul.f32 1.0, %v385
    %v387 = vtanh.pop %v367
    %v389 = vrot.slane %v334, 7
    %v391 = vmul.f32 %v386, %v389
    %393 = vrot.lane.b32.xlu0 %v387, 64
    %v394 = vpop.permute.xlu0 %393
    %v396 = vmul.f32 %v386, %v394
    %398 = vrot.lane.b32.xlu0 %v396, 32
    %v399 = vpop.permute.xlu0 %398
    %v401 = vadd.f32 %v391, %v399
    %v402 = vtanh.pop %v401
    %404 = vrot.lane.b32.xlu0 %v402, 64
    %v405 = vpop.permute.xlu0 %404
    %v407 = vmul.f32 %v386, %v405
    %v408 = vpack.c.bf16 %v407, %v407
    %v410 = vrot.slane %v408, 2
    %411 = vrot.lane.b32.xlu0 %v410, 32
    %v412 = vpop.permute.xlu0 %411
    %v414 = vsel %vm91, %v412, 0
    %416 = vmatpush.bf16.msra.mxu0 0
    %417 = vmatpush.bf16.msra.mxu0 0
    %418 = vmatpush.bf16.msra.mxu0 0
    %419 = vmatpush.bf16.msra.mxu0 0
    %420 = vmatpush.bf16.msra.mxu0 0
    %421 = vmatpush.bf16.msra.mxu0 0
    %422 = vmatpush.bf16.msra.mxu0 %v88
    %423 = vmatpush.bf16.msra.mxu0 %v87
    %424 = vmatmul.bf16.gmra.mxu0 %v414
    %v425 = vpop.f32.mrf.mxu0
    %v426 = vadd.f32 0.0, %v425
    %v427 = vpop.f32.mrf.mxu0
    %428 = vdwg.mxu0
    %v430 = vrot.slane %v426, 3
    %v432 = vadd.f32 %v77, %v430
    %v433 = vxor.u32 %v432, 2147483648
    %v434 = vmul.f32 %v433, 1.442695
    %v435 = vpow.pop %v434
    %v436 = vadd.f32 %v435, 1.0
    %v437 = vrcp.pop %v436
    %v438 = vmul.f32 %v436, %v437
    %v439 = vsub.f32 1.0, %v438
    %v440 = vmul.f32 %v437, %v439
    %v441 = vadd.f32 %v437, %v440
    %vm442 = vweird.f32 %v436
    %vm443 = vweird.f32 %v437
    %vm444 = vmor %vm442, %vm443
    %v445 = vsel %vm444, %v437, %v441
    %v446 = vand.u32 2147483647, %v436
    %vm447 = vcmp.eq.f32.partialorder %v446, 8.507059e+37
    %v448 = vand.u32 %v436, 2147483648
    %v449 = vor.u32 1.1754944e-38, %v448
    %v450 = vsel %vm447, %v449, %v445
    %v451 = vmul.f32 1.0, %v450
    %v452 = vtanh.pop %v432
    %v454 = vrot.slane %v401, 7
    %v456 = vmul.f32 %v451, %v454
    %458 = vrot.lane.b32.xlu0 %v452, 64
    %v459 = vpop.permute.xlu0 %458
    %v461 = vmul.f32 %v451, %v459
    %463 = vrot.lane.b32.xlu0 %v461, 32
    %v464 = vpop.permute.xlu0 %463
    %v466 = vadd.f32 %v456, %v464
    %v467 = vtanh.pop %v466
    %469 = vrot.lane.b32.xlu0 %v467, 64
    %v470 = vpop.permute.xlu0 %469
    %v472 = vmul.f32 %v451, %v470
    %v473 = vpack.c.bf16 %v472, %v472
    %v475 = vshrl.u32 %v473, 16
    %v477 = vrot.slane %v475, 2
    %478 = vrot.lane.b32.xlu0 %v477, 32
    %v479 = vpop.permute.xlu0 %478
    %v481 = vsel %vm91, %v479, 0
    %483 = vmatpush.bf16.msra.mxu0 0
    %484 = vmatpush.bf16.msra.mxu0 0
    %485 = vmatpush.bf16.msra.mxu0 0
    %486 = vmatpush.bf16.msra.mxu0 0
    %487 = vmatpush.bf16.msra.mxu0 0
    %488 = vmatpush.bf16.msra.mxu0 0
    %489 = vmatpush.bf16.msra.mxu0 %v88
    %490 = vmatpush.bf16.msra.mxu0 %v87
    %491 = vmatmul.bf16.gmra.mxu0 %v481
    %v492 = vpop.f32.mrf.mxu0
    %v493 = vadd.f32 0.0, %v492
    %v494 = vpop.f32.mrf.mxu0
    %495 = vdwg.mxu0
    %v497 = vrot.slane %v493, 2
    %v499 = vadd.f32 %v77, %v497
    %v500 = vxor.u32 %v499, 2147483648
    %v501 = vmul.f32 %v500, 1.442695
    %v502 = vpow.pop %v501
    %v503 = vadd.f32 %v502, 1.0
    %v504 = vrcp.pop %v503
    %v505 = vmul.f32 %v503, %v504
    %v506 = vsub.f32 1.0, %v505
    %v507 = vmul.f32 %v504, %v506
    %v508 = vadd.f32 %v504, %v507
    %vm509 = vweird.f32 %v503
    %vm510 = vweird.f32 %v504
    %vm511 = vmor %vm509, %vm510
    %v512 = vsel %vm511, %v504, %v508
    %v513 = vand.u32 2147483647, %v503
    %vm514 = vcmp.eq.f32.partialorder %v513, 8.507059e+37
    %v515 = vand.u32 %v503, 2147483648
    %v516 = vor.u32 1.1754944e-38, %v515
    %v517 = vsel %vm514, %v516, %v512
    %v518 = vmul.f32 1.0, %v517
    %v519 = vtanh.pop %v499
    %v521 = vrot.slane %v466, 7
    %v523 = vmul.f32 %v518, %v521
    %525 = vrot.lane.b32.xlu0 %v519, 64
    %v526 = vpop.permute.xlu0 %525
    %v528 = vmul.f32 %v518, %v526
    %530 = vrot.lane.b32.xlu0 %v528, 32
    %v531 = vpop.permute.xlu0 %530
    %v533 = vadd.f32 %v523, %v531
    %v534 = vtanh.pop %v533
    %536 = vrot.lane.b32.xlu0 %v534, 64
    %v537 = vpop.permute.xlu0 %536
    %v539 = vmul.f32 %v518, %v537
    %v540 = vpack.c.bf16 %v539, %v539
    %v542 = vrot.slane %v540, 3
    %543 = vrot.lane.b32.xlu0 %v542, 32
    %v544 = vpop.permute.xlu0 %543
    %v546 = vsel %vm91, %v544, 0
    %548 = vmatpush.bf16.msra.mxu0 0
    %549 = vmatpush.bf16.msra.mxu0 0
    %550 = vmatpush.bf16.msra.mxu0 0
    %551 = vmatpush.bf16.msra.mxu0 0
    %552 = vmatpush.bf16.msra.mxu0 0
    %553 = vmatpush.bf16.msra.mxu0 0
    %554 = vmatpush.bf16.msra.mxu0 %v88
    %555 = vmatpush.bf16.msra.mxu0 %v87
    %556 = vmatmul.bf16.gmra.mxu0 %v546
    %v557 = vpop.f32.mrf.mxu0
    %v558 = vadd.f32 0.0, %v557
    %v559 = vpop.f32.mrf.mxu0
    %560 = vdwg.mxu0
    %v562 = vrot.slane %v558, 1
    %v564 = vadd.f32 %v77, %v562
    %v565 = vxor.u32 %v564, 2147483648
    %v566 = vmul.f32 %v565, 1.442695
    %v567 = vpow.pop %v566
    %v568 = vadd.f32 %v567, 1.0
    %v569 = vrcp.pop %v568
    %v570 = vmul.f32 %v568, %v569
    %v571 = vsub.f32 1.0, %v570
    %v572 = vmul.f32 %v569, %v571
    %v573 = vadd.f32 %v569, %v572
    %vm574 = vweird.f32 %v568
    %vm575 = vweird.f32 %v569
    %vm576 = vmor %vm574, %vm575
    %v577 = vsel %vm576, %v569, %v573
    %v578 = vand.u32 2147483647, %v568
    %vm579 = vcmp.eq.f32.partialorder %v578, 8.507059e+37
    %v580 = vand.u32 %v568, 2147483648
    %v581 = vor.u32 1.1754944e-38, %v580
    %v582 = vsel %vm579, %v581, %v577
    %v583 = vmul.f32 1.0, %v582
    %v584 = vtanh.pop %v564
    %v586 = vrot.slane %v533, 7
    %v588 = vmul.f32 %v583, %v586
    %590 = vrot.lane.b32.xlu0 %v584, 64
    %v591 = vpop.permute.xlu0 %590
    %v593 = vmul.f32 %v583, %v591
    %595 = vrot.lane.b32.xlu0 %v593, 32
    %v596 = vpop.permute.xlu0 %595
    %v598 = vadd.f32 %v588, %v596
    %v599 = vtanh.pop %v598
    %601 = vrot.lane.b32.xlu0 %v599, 64
    %v602 = vpop.permute.xlu0 %601
    %v604 = vmul.f32 %v583, %v602
    %vm605 = vcmask 1040384
    %v606 = vsel %vm605, %v145, %v209
    %vm607 = vcmask 1041408
    %v608 = vsel %vm607, %v606, %v275
    %vm609 = vcmask 1042432
    %v610 = vsel %vm609, %v608, %v340
    %vm611 = vcmask 1043456
    %v612 = vsel %vm611, %v610, %v407
    %vm613 = vcmask 1044480
    %v614 = vsel %vm613, %v612, %v472
    %v615 = vsel %vm55, %v614, %v539
    %vm616 = vcmask 1046528
    %v617 = vsel %vm616, %v615, %v604
    %v618 = vld [vmem:[%s4] sm:$0xff]
    %v619 = vld [vmem:[%s4 + $0x8] sm:$0xff]
    %v620 = vld [vmem:[%s4 + $0x10] sm:$0xff]
    %v621 = vld [vmem:[%s4 + $0x18] sm:$0xff]
    %v622 = vld [vmem:[%s5] sm:$0x1]
    %v624 = vperm.slane %v622, 0
    %627 = vrot.lane.b32.xlu0 %v617, 32
    %v628 = vpop.permute.xlu0 %627
    %v629 = vsel %vm91, %v628, 0
    %631 = vmatpush.msra.mxu0 0.0
    %632 = vmatpush.msra.mxu0 0.0
    %633 = vmatpush.msra.mxu0 0.0
    %634 = vmatpush.msra.mxu0 0.0
    %635 = vmatpush.msra.mxu0 0.0
    %636 = vmatpush.msra.mxu0 0.0
    %637 = vmatpush.msra.mxu0 0.0
    %638 = vmatpush.msra.mxu0 0.0
    %639 = vmatpush.msra.mxu0 0.0
    %640 = vmatpush.msra.mxu0 0.0
    %641 = vmatpush.msra.mxu0 0.0
    %642 = vmatpush.msra.mxu0 0.0
    %643 = vmatpush.msra.mxu0 %v621
    %644 = vmatpush.msra.mxu0 %v620
    %645 = vmatpush.msra.mxu0 %v619
    %646 = vmatpush.msra.mxu0 %v618
    %647 = vmatmul.f32.gmra.mxu0 %v629
    %v648 = vpop.f32.mrf.mxu0
    %v649 = vadd.f32 %v624, %v648
    %650 = vdwg.mxu0
    %vm651 = vcmask 31744
    %v652 = vsel %vm651, %v649, -inf
    %653 = vmax.xlane.f32.xlu0 %v652
    %v654 = vpop.xlane.xlu0 %653
    %v655 = vsub.f32 %v649, %v654
    %v656 = vmul.f32 %v655, 1.442695
    %v657 = vpow.pop %v656
    %v658 = vsel %vm651, %v657, 0.0
    %659 = vadd.xlane.f32.xlu0 %v658
    %v660 = vpop.xlane.xlu0 %659
    %v661 = vrcp.pop %v660
    %v662 = vmul.f32 %v657, %v661
    %663 = vst.msk [vmem:[%s6] sm:$0xff] %vm651, %v662
    // Predicated region
    $region30: #{prediction_forward.1} parent=1 // pred_check
      _
    $region31: #{prediction_forward.1} parent=1 // pred_check_branch
      %665 = sbr.rel (0) target = $region33
    $region32: #{prediction_forward.1} parent=1 // pred_region
      _
    $region33: #{prediction_forward.1} parent=1 // pred_fallthru
      _
    // Predicated region
    $region34: #{prediction_forward.1} parent=1 // pred_check
      _
    $region35: #{prediction_forward.1} parent=1 // pred_check_branch
      %667 = sbr.rel (0) target = $region37
    $region36: #{prediction_forward.1} parent=1 // pred_region
      _
    $region37: #{prediction_forward.1} parent=1 // pred_fallthru
      _
    %668 = vsyncpa [#allocation3], 1

</llo_original>
